<compile_context>
chip_gen: v6e
topology: v6e:2x2x1
jax: 0.10.0
libtpu: 0.0.40
codegen_flags: <defaults>
</compile_context>

<pallas_src>
import functools

import jax
import jax.numpy as jnp
from jax.experimental import pallas as pl
from jax.experimental.pallas import tpu as pltpu


def _round_up(x, m):
    return (x + m - 1) // m * m


# ---------------------------------------------------------------------------
# Kernel 1: fused conv (im2col matmul, BN scale pre-folded into B) + bias + ReLU
#   a_ref:    (tm, K)   bf16 im2col rows
#   b_ref:    (K, Cp)   bf16 weights * bn_scale   (Cp = Cout padded to 128)
#   bias_ref: (1, Cp)   f32  beta - mean * scale
#   o_ref:    (tm, Cp)  bf16
# ---------------------------------------------------------------------------
def _conv_bn_relu_kernel(a_ref, b_ref, bias_ref, o_ref):
    acc = jnp.dot(a_ref[...], b_ref[...], preferred_element_type=jnp.float32)
    o_ref[...] = jnp.maximum(acc + bias_ref[...], 0.0).astype(o_ref.dtype)


# ---------------------------------------------------------------------------
# Kernel 2: MaxPool2d(kernel_size=3, stride=2) on NHWC, fully vectorized.
#   x_ref:     (1, Ho, Wo, C)  bf16 input block
#   o_ref:     (1, Hp, Wp, C)  f32 output block
#   stage_ref: (1, Ho, Wo, C)  f32 VMEM staging (contiguous load + cast)
#   wred_ref:  (1, Ho, Wp, C)  f32 VMEM W-reduced intermediate
# ---------------------------------------------------------------------------
def _maxpool_kernel(x_ref, o_ref, stage_ref, wred_ref, *, hp, wp, ksize, stride):
    # Stage the bf16 block as f32 in VMEM with one contiguous load; all strided
    # reads below operate on f32 scratch (proven layout path).
    stage_ref[...] = x_ref[...].astype(stage_ref.dtype)

    # W direction: ksize stride-`stride` sublane-strided reads, elementwise max.
    col_max = stage_ref[:, :, pl.ds(0, wp, stride=stride), :]       # (1,Ho,Wp,C)
    for dj in range(1, ksize):
        col_max = jnp.maximum(
            col_max, stage_ref[:, :, pl.ds(dj, wp, stride=stride), :])
    wred_ref[...] = col_max

    # H direction: ksize stride-`stride` reads over the leading H dim,
    # one bulk store (no per-row loop).
    row_max = wred_ref[:, pl.ds(0, hp, stride=stride), :, :]        # (1,Hp,Wp,C)
    for di in range(1, ksize):
        row_max = jnp.maximum(
            row_max, wred_ref[:, pl.ds(di, hp, stride=stride), :, :])
    o_ref[...] = row_max.astype(o_ref.dtype)


# ---------------------------------------------------------------------------
# Wrapper
# ---------------------------------------------------------------------------
def input_layer_forward(x, w, gamma, beta, run_mean, run_var, eps=1e-5):
    """x: (N, Cin, H, W) f32  ->  (N, Cout, Hp, Wp) f32 (NCHW, matches PyTorch)."""
    N, Cin, H, W = x.shape
    Cout = w.shape[0]
    KH = KW = 7
    stride, pad = 2, 3
    Ho = (H + 2 * pad - KH) // stride + 1
    Wo = (W + 2 * pad - KW) // stride + 1
    M = N * Ho * Wo
    K = KH * KW * Cin

    # ---- bf16, transpose-free im2col: NHWC bf16 copy, 49 strided slices,
    #      concatenated along the last axis in (kh, kw, c) order ----
    x_nhwc = jnp.transpose(x, (0, 2, 3, 1)).astype(jnp.bfloat16)
    xp = jnp.pad(x_nhwc, ((0, 0), (pad, pad), (pad, pad), (0, 0)))
    cols = []
    for kh in range(KH):
        for kw in range(KW):
            cols.append(xp[:, kh:kh + stride * (Ho - 1) + 1:stride,
                              kw:kw + stride * (Wo - 1) + 1:stride, :])
    A = jnp.concatenate(cols, axis=-1).reshape(M, K)        # (M, K) bf16

    # ---- M tiling: large tile to amortize per-step overhead ----
    tm = min(4096, _round_up(M, 8))
    M_pad = _round_up(M, tm)
    if M_pad != M:
        A = jnp.pad(A, ((0, M_pad - M), (0, 0)))

    # ---- BN (eval mode): fold scale into weights, keep shift as bias ----
    scale = gamma / jnp.sqrt(run_var + eps)
    bias = beta - run_mean * scale

    Cp = _round_up(Cout, 128)                                # lane-dense channels
    B = jnp.transpose(w, (2, 3, 1, 0)).reshape(K, Cout) * scale[None, :]
    B = jnp.pad(B, ((0, 0), (0, Cp - Cout))).astype(jnp.bfloat16)
    bias2 = jnp.pad(bias, (0, Cp - Cout)).reshape(1, Cp).astype(jnp.float32)

    conv_out = pl.pallas_call(
        _conv_bn_relu_kernel,
        out_shape=jax.ShapeDtypeStruct((M_pad, Cp), jnp.bfloat16),
        grid=(M_pad // tm,),
        in_specs=[
            pl.BlockSpec((tm, K), lambda i: (i, 0)),     # A streams per step
            pl.BlockSpec((K, Cp), lambda i: (0, 0)),     # weights resident
            pl.BlockSpec((1, Cp), lambda i: (0, 0)),     # bias resident
        ],
        out_specs=pl.BlockSpec((tm, Cp), lambda i: (i, 0)),
        compiler_params=pltpu.CompilerParams(
            dimension_semantics=("parallel",),
            vmem_limit_bytes=32 * 1024 * 1024,
        ),
    )(A, B, bias2)

    y_nhwc = conv_out[:M].reshape(N, Ho, Wo, Cp)             # bf16 intermediate

    # ---- MaxPool2d(3, 2), padding=0 (PyTorch default) ----
    kp, sp = 3, 2
    Hp = (Ho - kp) // sp + 1
    Wp = (Wo - kp) // sp + 1

    pooled = pl.pallas_call(
        functools.partial(_maxpool_kernel, hp=Hp, wp=Wp, ksize=kp, stride=sp),
        out_shape=jax.ShapeDtypeStruct((N, Hp, Wp, Cp), jnp.float32),
        grid=(N,),
        in_specs=[pl.BlockSpec((1, Ho, Wo, Cp), lambda n: (n, 0, 0, 0))],
        out_specs=pl.BlockSpec((1, Hp, Wp, Cp), lambda n: (n, 0, 0, 0)),
        scratch_shapes=[pltpu.VMEM((1, Ho, Wo, Cp), jnp.float32),
                        pltpu.VMEM((1, Ho, Wp, Cp), jnp.float32)],
        compiler_params=pltpu.CompilerParams(
            dimension_semantics=("parallel",),
            vmem_limit_bytes=48 * 1024 * 1024,
        ),
    )(y_nhwc)

    # Final NHWC->NCHW transpose left to XLA (small final tensor).
    return pooled[:, :, :, :Cout].transpose(0, 3, 1, 2)


# ---------------------------------------------------------------------------
# Pure-JAX reference (for correctness check)
# ---------------------------------------------------------------------------
def _reference(x, w, gamma, beta, rm, rv, eps=1e-5):
    y = jax.lax.conv_general_dilated(
        x, w, window_strides=(2, 2), padding=((3, 3), (3, 3)),
        dimension_numbers=("NCHW", "OIHW", "NCHW"),
        precision=jax.lax.Precision.HIGHEST)
    scale = gamma / jnp.sqrt(rv + eps)
    shift = beta - rm * scale
    y = y * scale[None, :, None, None] + shift[None, :, None, None]
    y = jnp.maximum(y, 0.0)
    y = jax.lax.reduce_window(y, -jnp.inf, jax.lax.max,
                              (1, 1, 3, 3), (1, 1, 2, 2), "VALID")
    return y


if __name__ == "__main__":
    N, Cin, H, W = 2, 4, 16, 16
    Cout = 32

    key = jax.random.PRNGKey(0)
    kx, kw, kg, kb, km, kv = jax.random.split(key, 6)

    x = jax.random.normal(kx, (N, Cin, H, W), dtype=jnp.float32)
    w = 0.1 * jax.random.normal(kw, (Cout, Cin, 7, 7), dtype=jnp.float32)
    gamma = 1.0 + 0.1 * jax.random.normal(kg, (Cout,), dtype=jnp.float32)
    beta = 0.1 * jax.random.normal(kb, (Cout,), dtype=jnp.float32)
    run_mean = 0.05 * jax.random.normal(km, (Cout,), dtype=jnp.float32)
    run_var = jax.random.uniform(kv, (Cout,), dtype=jnp.float32,
                                 minval=0.5, maxval=1.5)

    out = input_layer_forward(x, w, gamma, beta, run_mean, run_var)
    out = jax.block_until_ready(out)

    ref = jax.block_until_ready(_reference(x, w, gamma, beta, run_mean, run_var))
    assert out.shape == ref.shape, (out.shape, ref.shape)
    max_diff = float(jnp.max(jnp.abs(out - ref)))
    # Tolerance accounts for bf16 matmul inputs (f32 accumulation) and the
    # bf16 conv->pool intermediate.
    assert jnp.allclose(out, ref, rtol=2e-2, atol=5e-2), max_diff

    print("KERNEL_OK")
</pallas_src>

<mosaic_0001>
module attributes {stable_mosaic.version = 11 : i64} {
  func.func @_conv_bn_relu_kernel(%arg0: i32, %arg1: memref<128x196xbf16, #tpu.memory_space<vmem>>, %arg2: memref<196x128xbf16, #tpu.memory_space<vmem>>, %arg3: memref<1x128xf32, #tpu.memory_space<vmem>>, %arg4: memref<128x128xbf16, #tpu.memory_space<vmem>>) attributes {dimension_semantics = [#tpu.dimension_semantics<parallel>], iteration_bounds = array<i64: 1>, scalar_prefetch = 0 : i64, scratch_operands = 0 : i64, tpu.core_type = #tpu.core_type<tc>, window_params = [{transform_indices = @transform_0, window_bounds = array<i64: 128, 196>}, {pipeline_mode = #tpu.pipeline_mode<synchronous>, transform_indices = @transform_1, window_bounds = array<i64: 196, 128>}, {pipeline_mode = #tpu.pipeline_mode<synchronous>, transform_indices = @transform_2, window_bounds = array<i64: 1, 128>}, {transform_indices = @transform_3, window_bounds = array<i64: 128, 128>}]} {
    %c0 = arith.constant 0 : index
    %c0_0 = arith.constant 0 : index
    %0 = vector.load %arg1[%c0, %c0_0] : memref<128x196xbf16, #tpu.memory_space<vmem>>, vector<128x196xbf16>
    %c0_1 = arith.constant 0 : index
    %c0_2 = arith.constant 0 : index
    %1 = vector.load %arg2[%c0_1, %c0_2] : memref<196x128xbf16, #tpu.memory_space<vmem>>, vector<196x128xbf16>
    %cst = arith.constant dense<0.000000e+00> : vector<128x128xf32>
    %2 = tpu.matmul %0, %1, %cst {dimension_numbers = #tpu.dot_dimension_numbers<[1], [0], [0], [1], [0, 0, 1, 1], [], []>} : vector<128x196xbf16>, vector<196x128xbf16>, vector<128x128xf32> -> vector<128x128xf32>
    %c0_3 = arith.constant 0 : index
    %c0_4 = arith.constant 0 : index
    %3 = vector.load %arg3[%c0_3, %c0_4] : memref<1x128xf32, #tpu.memory_space<vmem>>, vector<1x128xf32>
    %4 = vector.broadcast %3 : vector<1x128xf32> to vector<128x128xf32>
    %5 = arith.addf %2, %4 : vector<128x128xf32>
    %cst_5 = arith.constant 0.000000e+00 : f32
    %6 = vector.broadcast %cst_5 : f32 to vector<128x128xf32>
    %7 = arith.maximumf %5, %6 : vector<128x128xf32>
    %8 = arith.truncf %7 : vector<128x128xf32> to vector<128x128xbf16>
    %c0_6 = arith.constant 0 : index
    %c0_7 = arith.constant 0 : index
    %9 = vector.load %arg4[%c0_6, %c0_7] : memref<128x128xbf16, #tpu.memory_space<vmem>>, vector<128x128xbf16>
    tpu.vector_store %arg4[%c0_6, %c0_7], %8 {strides = array<i32>} : memref<128x128xbf16, #tpu.memory_space<vmem>>, vector<128x128xbf16>,
    return
  }
  func.func @transform_0(%arg0: i32) -> (i32, i32) {
    %c0_i32 = arith.constant 0 : i32
    %c0_i32_0 = arith.constant 0 : i32
    return %arg0, %c0_i32 : i32, i32
  }
  func.func @transform_1(%arg0: i32) -> (i32, i32) {
    %c0_i32 = arith.constant 0 : i32
    %c0_i32_0 = arith.constant 0 : i32
    %c0_i32_1 = arith.constant 0 : i32
    return %c0_i32, %c0_i32_0 : i32, i32
  }
  func.func @transform_2(%arg0: i32) -> (i32, i32) {
    %c0_i32 = arith.constant 0 : i32
    %c0_i32_0 = arith.constant 0 : i32
    %c0_i32_1 = arith.constant 0 : i32
    return %c0_i32, %c0_i32_0 : i32, i32
  }
  func.func @transform_3(%arg0: i32) -> (i32, i32) {
    %c0_i32 = arith.constant 0 : i32
    %c0_i32_0 = arith.constant 0 : i32
    return %arg0, %c0_i32 : i32, i32
  }
}

</mosaic_0001>

<llo_original>
// kernel: tpu_custom_call.1
$region0: #{tpu_custom_call.1}
  #allocation0 [shape = 'u32[]', space=smem, size = 0x4, offset = 0x4, fixed_abs, tag = 'smem constant byte address 0x4 - core index']
  #allocation1 [shape = 'u32[144,128]{1,0:T(1,128)}', space=vmem, size = 0x12000, scoped, tag = 'internal scratch']
  %s0 = inlined_call_operand.vmem [shape: bf16[128,196], index: 0, kind: input, shape index: {}]
  %s1 = inlined_call_operand.vmem [shape: bf16[196,128], index: 1, kind: input, shape index: {}]
  %s2 = inlined_call_operand.vmem [shape: f32[1,128], index: 2, kind: input, shape index: {}]
  %s3 = inlined_call_operand.hbm [shape: bf16[128,128], index: 3, kind: output, shape index: {}]
  %s4 = sld [smem:[#allocation0]]
  $region22: #{tpu_custom_call.1} parent=0
    _
  %s6 = ssub.s32 1, %s4
  %s7 = scalar_select 0, %s6, %s4
  $region1: #{tpu_custom_call.1} parent=0
    #allocation2 [shape = 'u8[32768]{0}', space=vmem, size = 0x8000, scoped, tag = 'output window, operand 0, single buffered']
    #allocation3 [shape = 's32[1]{0}', space=sflag, size = 0x4, scoped, tag = 'scoped memory for tpu_custom_call.1']
    %8 = vsyncpa [#allocation3], 0
    // Predicated region
    $region2: #{tpu_custom_call.1} parent=1 // pred_check
      _
    $region3: #{tpu_custom_call.1} parent=1 // pred_check_branch
      %10 = sbr.rel (0) target = $region5
    $region4: #{tpu_custom_call.1} parent=1 // pred_region
      _
    $region5: #{tpu_custom_call.1} parent=1 // pred_fallthru
      _
    // Predicated region
    $region6: #{tpu_custom_call.1} parent=1 // pred_check
      _
    $region7: #{tpu_custom_call.1} parent=1 // pred_check_branch
      %12 = sbr.rel (0) target = $region9
    $region8: #{tpu_custom_call.1} parent=1 // pred_region
      _
    $region9: #{tpu_custom_call.1} parent=1 // pred_fallthru
      _
    // Predicated region
    $region10: #{tpu_custom_call.1} parent=1 // pred_check
      _
    $region11: #{tpu_custom_call.1} parent=1 // pred_check_branch
      %14 = sbr.rel (0) target = $region13
    $region12: #{tpu_custom_call.1} parent=1 // pred_region
      _
    $region13: #{tpu_custom_call.1} parent=1 // pred_fallthru
      _
    %v16 = vld [vmem:[%s0] sm:$0xff]
    %v17 = vld [vmem:[%s0 + $0x8] sm:$0xff]
    %v18 = vld [vmem:[%s0 + $0x10] sm:$0xff]
    %v19 = vld [vmem:[%s0 + $0x18] sm:$0xff]
    %v20 = vld [vmem:[%s0 + $0x20] sm:$0xff]
    %v21 = vld [vmem:[%s0 + $0x28] sm:$0xff]
    %v22 = vld [vmem:[%s0 + $0x30] sm:$0xff]
    %v23 = vld [vmem:[%s0 + $0x38] sm:$0xff]
    %v24 = vld [vmem:[%s0 + $0x40] sm:$0xff]
    %v25 = vld [vmem:[%s0 + $0x48] sm:$0xff]
    %v26 = vld [vmem:[%s0 + $0x50] sm:$0xff]
    %v27 = vld [vmem:[%s0 + $0x58] sm:$0xff]
    %v28 = vld [vmem:[%s0 + $0x60] sm:$0xff]
    %v29 = vld [vmem:[%s0 + $0x68] sm:$0xff]
    %v30 = vld [vmem:[%s0 + $0x70] sm:$0xff]
    %v31 = vld [vmem:[%s0 + $0x78] sm:$0xff]
    %v32 = vld [vmem:[%s1] sm:$0xf]
    %v33 = vld [vmem:[%s1 + $0x4] sm:$0xf]
    %v34 = vld [vmem:[%s1 + $0x8] sm:$0xf]
    %v35 = vld [vmem:[%s1 + $0xc] sm:$0xf]
    %v36 = vld [vmem:[%s1 + $0x10] sm:$0xf]
    %v37 = vld [vmem:[%s1 + $0x14] sm:$0xf]
    %v38 = vld [vmem:[%s1 + $0x18] sm:$0xf]
    %v39 = vld [vmem:[%s1 + $0x1c] sm:$0xf]
    %v40 = vld [vmem:[%s1 + $0x20] sm:$0xf]
    %v41 = vld [vmem:[%s1 + $0x24] sm:$0xf]
    %v42 = vld [vmem:[%s1 + $0x28] sm:$0xf]
    %v43 = vld [vmem:[%s1 + $0x2c] sm:$0xf]
    %v44 = vld [vmem:[%s1 + $0x30] sm:$0xf]
    %v45 = vld [vmem:[%s1 + $0x34] sm:$0xf]
    %v46 = vld [vmem:[%s1 + $0x38] sm:$0xf]
    %v47 = vld [vmem:[%s1 + $0x3c] sm:$0xf]
    %v48 = vld [vmem:[%s1 + $0x40] sm:$0xf]
    %v49 = vld [vmem:[%s1 + $0x44] sm:$0xf]
    %v50 = vld [vmem:[%s1 + $0x48] sm:$0xf]
    %v51 = vld [vmem:[%s1 + $0x4c] sm:$0xf]
    %v52 = vld [vmem:[%s1 + $0x50] sm:$0xf]
    %v53 = vld [vmem:[%s1 + $0x54] sm:$0xf]
    %v54 = vld [vmem:[%s1 + $0x58] sm:$0xf]
    %v55 = vld [vmem:[%s1 + $0x5c] sm:$0xf]
    %v56 = vld [vmem:[%s1 + $0x60] sm:$0x3]
    %v57 = vld [vmem:[%s2] sm:$0x1]
    %v59 = vlaneseq
    %v60 = vshrl.u32 %v59, 7
    %v61 = vsub.s32 0, %v60
    %v62 = vrot.slane %v57, %v61
    %v80 = vunpack.c.l.b16 %v16
    %v81 = vunpack.c.h.b16 %v16
    %v82 = vunpack.c.l.b16 %v17
    %v83 = vunpack.c.h.b16 %v17
    %v84 = vunpack.c.l.b16 %v18
    %v85 = vunpack.c.h.b16 %v18
    %v86 = vunpack.c.l.b16 %v19
    %v87 = vunpack.c.h.b16 %v19
    %v88 = vunpack.c.l.b16 %v20
    %v89 = vunpack.c.h.b16 %v20
    %v90 = vunpack.c.l.b16 %v21
    %v91 = vunpack.c.h.b16 %v21
    %v92 = vunpack.c.l.b16 %v22
    %v93 = vunpack.c.h.b16 %v22
    %v94 = vunpack.c.l.b16 %v23
    %v95 = vunpack.c.h.b16 %v23
    %v96 = vunpack.c.l.b16 %v24
    %v97 = vunpack.c.h.b16 %v24
    %v98 = vunpack.c.l.b16 %v25
    %v99 = vunpack.c.h.b16 %v25
    %v100 = vunpack.c.l.b16 %v26
    %v101 = vunpack.c.h.b16 %v26
    %v102 = vunpack.c.l.b16 %v27
    %v103 = vunpack.c.h.b16 %v27
    %v104 = vunpack.c.l.b16 %v28
    %v105 = vunpack.c.h.b16 %v28
    %v106 = vunpack.c.l.b16 %v29
    %v107 = vunpack.c.h.b16 %v29
    %v108 = vunpack.c.l.b16 %v30
    %v109 = vunpack.c.h.b16 %v30
    %v110 = vunpack.c.l.b16 %v31
    %v111 = vunpack.c.h.b16 %v31
    %v112 = vpack.c.b16 %v82, %v80
    %v113 = vpack.c.b16 %v83, %v81
    %v114 = vpack.c.b16 %v86, %v84
    %v115 = vpack.c.b16 %v87, %v85
    %v116 = vpack.c.b16 %v90, %v88
    %v117 = vpack.c.b16 %v91, %v89
    %v118 = vpack.c.b16 %v94, %v92
    %v119 = vpack.c.b16 %v95, %v93
    %v120 = vpack.c.b16 %v98, %v96
    %v121 = vpack.c.b16 %v99, %v97
    %v122 = vpack.c.b16 %v102, %v100
    %v123 = vpack.c.b16 %v103, %v101
    %v124 = vpack.c.b16 %v106, %v104
    %v125 = vpack.c.b16 %v107, %v105
    %v126 = vpack.c.b16 %v110, %v108
    %v127 = vpack.c.b16 %v111, %v109
    %v161 = vunpack.c.l.b16 %v32
    %v162 = vunpack.c.l.b16 %v33
    %v163 = vunpack.c.l.b16 %v34
    %v164 = vunpack.c.l.b16 %v35
    %v165 = vunpack.c.l.b16 %v36
    %v166 = vunpack.c.l.b16 %v37
    %v167 = vunpack.c.l.b16 %v38
    %v168 = vunpack.c.l.b16 %v39
    %v169 = vunpack.c.l.b16 %v40
    %v170 = vunpack.c.l.b16 %v41
    %v171 = vunpack.c.l.b16 %v42
    %v172 = vunpack.c.l.b16 %v43
    %v173 = vunpack.c.l.b16 %v44
    %v174 = vunpack.c.l.b16 %v45
    %v175 = vunpack.c.l.b16 %v46
    %v176 = vunpack.c.l.b16 %v47
    %v177 = vunpack.c.l.b16 %v48
    %v178 = vunpack.c.l.b16 %v49
    %v179 = vunpack.c.l.b16 %v50
    %v180 = vunpack.c.l.b16 %v51
    %v181 = vunpack.c.l.b16 %v52
    %v182 = vunpack.c.l.b16 %v53
    %v183 = vunpack.c.l.b16 %v54
    %v184 = vunpack.c.l.b16 %v55
    %v185 = vunpack.c.l.b16 %v56
    %v186 = vpack.c.b16 %v162, %v161
    %v187 = vpack.c.b16 %v164, %v163
    %v188 = vpack.c.b16 %v166, %v165
    %v189 = vpack.c.b16 %v168, %v167
    %v190 = vpack.c.b16 %v170, %v169
    %v191 = vpack.c.b16 %v172, %v171
    %v192 = vpack.c.b16 %v174, %v173
    %v193 = vpack.c.b16 %v176, %v175
    %v194 = vpack.c.b16 %v178, %v177
    %v195 = vpack.c.b16 %v180, %v179
    %v196 = vpack.c.b16 %v182, %v181
    %v197 = vpack.c.b16 %v184, %v183
    %v198 = vpack.c.b16 %v185, %v185
    %vm211 = vcmask 556032
    %v213 = vsel %vm211, %v113, 0
    %v216 = vsel %vm211, %v115, 0
    %v219 = vsel %vm211, %v117, 0
    %v222 = vsel %vm211, %v119, 0
    %v225 = vsel %vm211, %v121, 0
    %v228 = vsel %vm211, %v123, 0
    %v231 = vsel %vm211, %v125, 0
    %v234 = vsel %vm211, %v127, 0
    %vm236 = vcmask 1041408
    %v238 = vsel %vm236, %v198, 0
    %240 = vmatprep.subr.bf16.mxu0 0
    %241 = vmatpush1.bf16.msra.mxu0 %v193
    %242 = vmatprep.subr.bf16.mxu0 0
    %243 = vmatpush1.bf16.msra.mxu0 %v192
    %244 = vmatprep.subr.bf16.mxu0 0
    %245 = vmatpush1.bf16.msra.mxu0 %v191
    %246 = vmatprep.subr.bf16.mxu0 0
    %247 = vmatpush1.bf16.msra.mxu0 %v190
    %248 = vmatprep.subr.bf16.mxu0 0
    %249 = vmatpush1.bf16.msra.mxu0 %v189
    %250 = vmatprep.subr.bf16.mxu0 0
    %251 = vmatpush1.bf16.msra.mxu0 %v188
    %252 = vmatprep.subr.bf16.mxu0 0
    %253 = vmatpush1.bf16.msra.mxu0 %v187
    %254 = vmatprep.subr.bf16.mxu0 0
    %255 = vmatpush1.bf16.msra.mxu0 %v186
    %256 = vmatprep.subr.bf16.mxu0 0
    %257 = vmatpush2.bf16.msra.mxu0 0
    %258 = vmatprep.subr.bf16.mxu0 0
    %259 = vmatpush2.bf16.msra.mxu0 0
    %260 = vmatprep.subr.bf16.mxu0 0
    %261 = vmatpush2.bf16.msra.mxu0 0
    %262 = vmatprep.subr.bf16.mxu0 0
    %263 = vmatpush2.bf16.msra.mxu0 %v238
    %264 = vmatprep.subr.bf16.mxu0 0
    %265 = vmatpush2.bf16.msra.mxu0 %v197
    %266 = vmatprep.subr.bf16.mxu0 0
    %267 = vmatpush2.bf16.msra.mxu0 %v196
    %268 = vmatprep.subr.bf16.mxu0 0
    %269 = vmatpush2.bf16.msra.mxu0 %v195
    %270 = vmatprep.subr.bf16.mxu0 0
    %271 = vmatpush2.bf16.msra.mxu0 %v194
    %272 = vmatprep.mubr.bf16.mxu0 %v213
    %273 = vmatmul.mubr.bf16.gmra.mxu0 %v112
    %v274 = vpop.f32.mrf.mxu0
    %v275 = vadd.f32 %v62, %v274
    %v276 = vpop.f32.mrf.mxu0
    %v277 = vpop.f32.mrf.mxu0
    %v278 = vadd.f32 %v62, %v277
    %v279 = vpop.f32.mrf.mxu0
    %280 = vmatprep.mubr.bf16.mxu0 %v216
    %281 = vmatmul.mubr.bf16.gmra.mxu0 %v114
    %v282 = vpop.f32.mrf.mxu0
    %v283 = vadd.f32 %v62, %v282
    %v284 = vpop.f32.mrf.mxu0
    %v285 = vpop.f32.mrf.mxu0
    %v286 = vadd.f32 %v62, %v285
    %v287 = vpop.f32.mrf.mxu0
    %288 = vmatprep.mubr.bf16.mxu0 %v219
    %289 = vmatmul.mubr.bf16.gmra.mxu0 %v116
    %v290 = vpop.f32.mrf.mxu0
    %v291 = vadd.f32 %v62, %v290
    %v292 = vpop.f32.mrf.mxu0
    %v293 = vpop.f32.mrf.mxu0
    %v294 = vadd.f32 %v62, %v293
    %v295 = vpop.f32.mrf.mxu0
    %296 = vmatprep.mubr.bf16.mxu0 %v222
    %297 = vmatmul.mubr.bf16.gmra.mxu0 %v118
    %v298 = vpop.f32.mrf.mxu0
    %v299 = vadd.f32 %v62, %v298
    %v300 = vpop.f32.mrf.mxu0
    %v301 = vpop.f32.mrf.mxu0
    %v302 = vadd.f32 %v62, %v301
    %v303 = vpop.f32.mrf.mxu0
    %304 = vmatprep.mubr.bf16.mxu0 %v225
    %305 = vmatmul.mubr.bf16.gmra.mxu0 %v120
    %v306 = vpop.f32.mrf.mxu0
    %v307 = vadd.f32 %v62, %v306
    %v308 = vpop.f32.mrf.mxu0
    %v309 = vpop.f32.mrf.mxu0
    %v310 = vadd.f32 %v62, %v309
    %v311 = vpop.f32.mrf.mxu0
    %312 = vmatprep.mubr.bf16.mxu0 %v228
    %313 = vmatmul.mubr.bf16.gmra.mxu0 %v122
    %v314 = vpop.f32.mrf.mxu0
    %v315 = vadd.f32 %v62, %v314
    %v316 = vpop.f32.mrf.mxu0
    %v317 = vpop.f32.mrf.mxu0
    %v318 = vadd.f32 %v62, %v317
    %v319 = vpop.f32.mrf.mxu0
    %320 = vmatprep.mubr.bf16.mxu0 %v231
    %321 = vmatmul.mubr.bf16.gmra.mxu0 %v124
    %v322 = vpop.f32.mrf.mxu0
    %v323 = vadd.f32 %v62, %v322
    %v324 = vpop.f32.mrf.mxu0
    %v325 = vpop.f32.mrf.mxu0
    %v326 = vadd.f32 %v62, %v325
    %v327 = vpop.f32.mrf.mxu0
    %328 = vmatprep.mubr.bf16.mxu0 %v234
    %329 = vmatmul.mubr.bf16.gmra.mxu0 %v126
    %v330 = vpop.f32.mrf.mxu0
    %v331 = vadd.f32 %v62, %v330
    %v332 = vpop.f32.mrf.mxu0
    %v333 = vpop.f32.mrf.mxu0
    %v334 = vadd.f32 %v62, %v333
    %v335 = vpop.f32.mrf.mxu0
    %336 = vdwg.mxu0
    %v337 = vmax.f32 %v275, 0.0
    %v338 = vmax.f32 %v278, 0.0
    %v339 = vmax.f32 %v283, 0.0
    %v340 = vmax.f32 %v286, 0.0
    %v341 = vmax.f32 %v291, 0.0
    %v342 = vmax.f32 %v294, 0.0
    %v343 = vmax.f32 %v299, 0.0
    %v344 = vmax.f32 %v302, 0.0
    %v345 = vmax.f32 %v307, 0.0
    %v346 = vmax.f32 %v310, 0.0
    %v347 = vmax.f32 %v315, 0.0
    %v348 = vmax.f32 %v318, 0.0
    %v349 = vmax.f32 %v323, 0.0
    %v350 = vmax.f32 %v326, 0.0
    %v351 = vmax.f32 %v331, 0.0
    %v352 = vmax.f32 %v334, 0.0
    %v353 = vpack.c.bf16 %v338, %v337
    %v354 = vpack.c.bf16 %v340, %v339
    %v355 = vpack.c.bf16 %v342, %v341
    %v356 = vpack.c.bf16 %v344, %v343
    %v357 = vpack.c.bf16 %v346, %v345
    %v358 = vpack.c.bf16 %v348, %v347
    %v359 = vpack.c.bf16 %v350, %v349
    %v360 = vpack.c.bf16 %v352, %v351
    %v369 = vunpack.c.l.b16 %v353
    %v370 = vunpack.c.h.b16 %v353
    %v371 = vunpack.c.l.b16 %v354
    %v372 = vunpack.c.h.b16 %v354
    %v373 = vunpack.c.l.b16 %v355
    %v374 = vunpack.c.h.b16 %v355
    %v375 = vunpack.c.l.b16 %v356
    %v376 = vunpack.c.h.b16 %v356
    %v377 = vunpack.c.l.b16 %v357
    %v378 = vunpack.c.h.b16 %v357
    %v379 = vunpack.c.l.b16 %v358
    %v380 = vunpack.c.h.b16 %v358
    %v381 = vunpack.c.l.b16 %v359
    %v382 = vunpack.c.h.b16 %v359
    %v383 = vunpack.c.l.b16 %v360
    %v384 = vunpack.c.h.b16 %v360
    %v385 = vpack.c.b16 %v369, %v369
    %v386 = vpack.c.b16 %v370, %v370
    %v387 = vpack.c.b16 %v371, %v371
    %v388 = vpack.c.b16 %v372, %v372
    %v389 = vpack.c.b16 %v373, %v373
    %v390 = vpack.c.b16 %v374, %v374
    %v391 = vpack.c.b16 %v375, %v375
    %v392 = vpack.c.b16 %v376, %v376
    %v393 = vpack.c.b16 %v377, %v377
    %v394 = vpack.c.b16 %v378, %v378
    %v395 = vpack.c.b16 %v379, %v379
    %v396 = vpack.c.b16 %v380, %v380
    %v397 = vpack.c.b16 %v381, %v381
    %v398 = vpack.c.b16 %v382, %v382
    %v399 = vpack.c.b16 %v383, %v383
    %v400 = vpack.c.b16 %v384, %v384
    %417 = vst [vmem:[#allocation2] sm:$0xf] %v385
    %418 = vst [vmem:[#allocation2 + $0x4] sm:$0xf] %v386
    %419 = vst [vmem:[#allocation2 + $0x8] sm:$0xf] %v387
    %420 = vst [vmem:[#allocation2 + $0xc] sm:$0xf] %v388
    %421 = vst [vmem:[#allocation2 + $0x10] sm:$0xf] %v389
    %422 = vst [vmem:[#allocation2 + $0x14] sm:$0xf] %v390
    %423 = vst [vmem:[#allocation2 + $0x18] sm:$0xf] %v391
    %424 = vst [vmem:[#allocation2 + $0x1c] sm:$0xf] %v392
    %425 = vst [vmem:[#allocation2 + $0x20] sm:$0xf] %v393
    %426 = vst [vmem:[#allocation2 + $0x24] sm:$0xf] %v394
    %427 = vst [vmem:[#allocation2 + $0x28] sm:$0xf] %v395
    %428 = vst [vmem:[#allocation2 + $0x2c] sm:$0xf] %v396
    %429 = vst [vmem:[#allocation2 + $0x30] sm:$0xf] %v397
    %430 = vst [vmem:[#allocation2 + $0x34] sm:$0xf] %v398
    %431 = vst [vmem:[#allocation2 + $0x38] sm:$0xf] %v399
    %432 = vst [vmem:[#allocation2 + $0x3c] sm:$0xf] %v400
    // Predicated region
    $region14: #{tpu_custom_call.1} parent=1 // pred_check
      _
    $region15: #{tpu_custom_call.1} parent=1 // pred_check_branch
      %434 = sbr.rel (0) target = $region17
    $region16: #{tpu_custom_call.1} parent=1 // pred_region
      %s436 = ssub.s32 1024, 1024
      %437 = vsyncadd [#allocation3], %s436
      %s438 = sshll.u32 [#allocation2], 4
      %s439 = int_to_ptr.vmem [resolvable:$true] %s438
      %444 = dma.vmem_to_hbm [thread:$0]  %s439, 1024, %s3, [#allocation3], 64, 64, 4
    $region17: #{tpu_custom_call.1} parent=1 // pred_fallthru
      _
    // Predicated region
    $region18: #{tpu_custom_call.1} parent=1 // pred_check
      _
    $region19: #{tpu_custom_call.1} parent=1 // pred_check_branch
      %446 = sbr.rel (0) target = $region21
    $region20: #{tpu_custom_call.1} parent=1 // pred_region
      %447 = dma.done [#allocation3], 1024
    $region21: #{tpu_custom_call.1} parent=1 // pred_fallthru
      _
    %448 = vsyncpa [#allocation3], 1

</llo_original>
